<compile_context>
chip_gen: v5e
topology: v5e:2x2
jax: 0.10.0
libtpu: 0.0.40
codegen_flags: <defaults>
</compile_context>

<pallas_src>
import inspect

import jax
import jax.numpy as jnp
from jax.experimental import pallas as pl
from jax.experimental.pallas import tpu as pltpu


# ---------------------------------------------------------------------------
# Kernel
# ---------------------------------------------------------------------------
def fcproc_kernel(x_ref, w1_ref, b1_ref, w2_ref, b2_ref, w3_ref, b3_ref, o_ref):
    """Fused Linear->ReLU x3 on one (tb, F) batch tile."""
    wdt = w1_ref.dtype  # MXU operand dtype (f32 or bf16)

    # Layer 1: [tb, F] @ [F, N1]  -- f32 accumulation, bias + ReLU in f32.
    h = jnp.dot(x_ref[...], w1_ref[...], preferred_element_type=jnp.float32)
    h = jnp.maximum(h + b1_ref[...], 0.0)

    # Layer 2: [tb, N1] @ [N1, N2]
    h = jnp.dot(h.astype(wdt), w2_ref[...], preferred_element_type=jnp.float32)
    h = jnp.maximum(h + b2_ref[...], 0.0)

    # Layer 3: [tb, N2] @ [N2, N3]
    h = jnp.dot(h.astype(wdt), w3_ref[...], preferred_element_type=jnp.float32)
    h = jnp.maximum(h + b3_ref[...], 0.0)

    # Store only the true H output columns (output array is NOT lane-padded).
    H = o_ref.shape[-1]
    o_ref[...] = h[:, :H].astype(o_ref.dtype)


# ---------------------------------------------------------------------------
# Helpers
# ---------------------------------------------------------------------------
def _round_up(n, m):
    return ((n + m - 1) // m) * m


def _pad2d(a, rows, cols):
    pr, pc = rows - a.shape[0], cols - a.shape[1]
    if pr == 0 and pc == 0:
        return a
    return jnp.pad(a, ((0, pr), (0, pc)))


def _supports_pipeline_mode():
    try:
        return (hasattr(pl, "Buffered")
                and "pipeline_mode" in inspect.signature(pl.BlockSpec).parameters)
    except (TypeError, ValueError):
        return False


_HAS_PIPELINE_MODE = _supports_pipeline_mode()


def _default_num_tensorcores():
    """Best-effort TensorCore count of device 0 (v7x reports 2; else 1)."""
    try:
        n = getattr(jax.devices()[0], "num_cores", 1)
        return int(n) if isinstance(n, int) and n >= 1 else 1
    except Exception:  # pragma: no cover
        return 1


def _pick_batch_tile(B, batch_tile, num_cores, min_rows_per_step=1024):
    """Large sublane-aligned batch tiles; single grid step for small B.

    - B <= batch_tile: ONE grid step (the grid is a serial loop on 1-TC
      chips), unless the chip has >= 2 TensorCores AND splitting still leaves
      >= min_rows_per_step rows per step (v7x megacore payoff threshold).
    - B  > batch_tile: tile at batch_tile (multiple of 8); the partial last
      tile is handled by Pallas OOB-block padding.
    """
    batch_tile = max(8, (batch_tile // 8) * 8)
    if B <= batch_tile:
        if num_cores >= 2 and B >= num_cores * min_rows_per_step:
            per_core = -(-B // num_cores)            # ceil
            return max(8, _round_up(per_core, 8))    # sublane-aligned
        return B                                     # block dim == full dim: legal
    return batch_tile


def prepare_fcproc_params(params, matmul_dtype=None):
    """Pad + cast weights/biases ONCE (hoisted out of the per-call wrapper).

    params: w1,b1,w2,b2,w3,b3 with weights stored [in, out] (transposed vs
    PyTorch).  matmul_dtype (e.g. jnp.bfloat16) selects the MXU operand dtype
    for x and the weights on every generation incl. v5e; accumulation, bias
    add and ReLU always stay float32.  bf16 narrows the inter-layer
    activations, so expect ~1e-2 deviation from a pure-f32 reference.
    """
    F = params["w1"].shape[0]
    H4, H2, H = params["w1"].shape[1], params["w2"].shape[1], params["w3"].shape[1]
    N1, N2, N3 = _round_up(H4, 128), _round_up(H2, 128), _round_up(H, 128)
    wdt = jnp.float32 if matmul_dtype is None else matmul_dtype
    return {
        "F": F, "H": H, "N1": N1, "N2": N2, "N3": N3, "matmul_dtype": wdt,
        "w1": _pad2d(params["w1"], F, N1).astype(wdt),
        "b1": _pad2d(params["b1"], 1, N1).astype(jnp.float32),
        "w2": _pad2d(params["w2"], N1, N2).astype(wdt),
        "b2": _pad2d(params["b2"], 1, N2).astype(jnp.float32),
        "w3": _pad2d(params["w3"], N2, N3).astype(wdt),
        "b3": _pad2d(params["b3"], 1, N3).astype(jnp.float32),
    }


# ---------------------------------------------------------------------------
# Forward wrapper
# ---------------------------------------------------------------------------
def fcproc_forward(x, prepared, *, batch_tile=2048, num_tensorcores=None):
    """x: [B, F] float array.  prepared: output of prepare_fcproc_params()."""
    B, F = x.shape
    assert F == prepared["F"], (F, prepared["F"])
    H, N1, N2, N3 = prepared["H"], prepared["N1"], prepared["N2"], prepared["N3"]
    wdt = prepared["matmul_dtype"]

    if num_tensorcores is None:
        num_tensorcores = _default_num_tensorcores()
    tb = _pick_batch_tile(B, batch_tile, num_tensorcores)
    grid = (pl.cdiv(B, tb),)

    x_in = x if x.dtype == wdt else x.astype(wdt)

    def const_spec(shape):
        # Constant index_map -> block stays resident in VMEM, never re-DMA'd.
        # Single-buffer it where the installed JAX supports pipeline_mode.
        if _HAS_PIPELINE_MODE:
            return pl.BlockSpec(shape, lambda i: (0, 0), pipeline_mode=pl.Buffered(1))
        return pl.BlockSpec(shape, lambda i: (0, 0))

    return pl.pallas_call(
        fcproc_kernel,
        # True-width (un-padded) output: no wasted HBM writes, no extra slice pass.
        out_shape=jax.ShapeDtypeStruct((B, H), x.dtype),
        grid_spec=pl.GridSpec(
            grid=grid,
            in_specs=[
                pl.BlockSpec((tb, F), lambda i: (i, 0)),     # x (batch-tiled)
                const_spec((F, N1)), const_spec((1, N1)),    # layer 1 (lane-padded)
                const_spec((N1, N2)), const_spec((1, N2)),   # layer 2 (lane-padded)
                const_spec((N2, N3)), const_spec((1, N3)),   # layer 3 (lane-padded)
            ],
            out_specs=pl.BlockSpec((tb, H), lambda i: (i, 0)),  # block last dim == H
        ),
        compiler_params=pltpu.CompilerParams(
            dimension_semantics=("parallel",),
            vmem_limit_bytes=32 * 1024 * 1024,  # headroom over v5e's 16 MiB default
        ),
    )(x_in, prepared["w1"], prepared["b1"], prepared["w2"], prepared["b2"],
      prepared["w3"], prepared["b3"])


# ---------------------------------------------------------------------------
# Init / reference (match the PyTorch module)
# ---------------------------------------------------------------------------
def init_fcproc_params(key, img_num_features, hidden_size=32):
    """Kaiming-normal (fan_in, relu gain) weights, zero biases — matches
    init(m, kaiming_normal_(nonlinearity='relu'), constant_(0)).
    Weights are stored transposed vs PyTorch, i.e. [in, out]."""
    dims = [img_num_features, hidden_size * 4, hidden_size * 2, hidden_size]
    params = {}
    keys = jax.random.split(key, 3)
    for idx, (fan_in, fan_out) in enumerate(zip(dims[:-1], dims[1:]), start=1):
        std = (2.0 / fan_in) ** 0.5  # kaiming normal, mode='fan_in', relu gain
        params[f"w{idx}"] = std * jax.random.normal(
            keys[idx - 1], (fan_in, fan_out), jnp.float32)
        params[f"b{idx}"] = jnp.zeros((1, fan_out), jnp.float32)
    return params


def fcproc_reference(x, params):
    h = x
    for i in (1, 2, 3):
        h = jnp.maximum(h @ params[f"w{i}"] + params[f"b{i}"], 0.0)
    return h


# ---------------------------------------------------------------------------
# Self-test
# ---------------------------------------------------------------------------
if __name__ == "__main__":
    key = jax.random.PRNGKey(0)
    k_param, k_x = jax.random.split(key)

    F = 64   # img_num_features
    H = 32   # hidden_size

    params = init_fcproc_params(k_param, F, H)

    # Padding / casts hoisted out of the forward path: prepare once, reuse.
    prep_f32 = prepare_fcproc_params(params)
    prep_bf16 = prepare_fcproc_params(params, matmul_dtype=jnp.bfloat16)

    # 1) Small exact f32 check — single grid step (B <= batch_tile).
    B_small = 8
    x_small = jax.random.normal(k_x, (B_small, F), jnp.float32)
    out = jax.block_until_ready(fcproc_forward(x_small, prep_f32))
    ref = fcproc_reference(x_small, params)
    assert out.shape == (B_small, H), out.shape
    assert jnp.allclose(out, ref, atol=1e-5, rtol=1e-5), "f32 mismatch vs reference"

    # 2) Multi-step grid with a partial last tile (40 = 16 + 16 + 8), f32 exact.
    B_mid = 40
    x_mid = jax.random.normal(jax.random.PRNGKey(1), (B_mid, F), jnp.float32)
    out_mid = jax.block_until_ready(
        fcproc_forward(x_mid, prep_f32, batch_tile=16))
    ref_mid = fcproc_reference(x_mid, params)
    assert out_mid.shape == (B_mid, H), out_mid.shape
    assert jnp.allclose(out_mid, ref_mid, atol=1e-5, rtol=1e-5), \
        "f32 partial-tile mismatch vs reference"

    # 3) bf16 MXU-operand streaming (valid on v5e/v6e/v7x; f32 accumulation).
    #    Inter-layer activations are bf16 too, so tolerance is intentionally loose.
    out_bf16 = jax.block_until_ready(fcproc_forward(x_mid, prep_bf16))
    assert out_bf16.shape == (B_mid, H), out_bf16.shape
    assert jnp.allclose(out_bf16, ref_mid, atol=1e-1, rtol=1e-1), \
        "bf16 mismatch vs reference"

    print("KERNEL_OK")
</pallas_src>

<mosaic_0001>
module attributes {stable_mosaic.version = 11 : i64} {
  func.func @fcproc_kernel(%arg0: i32, %arg1: memref<8x64xf32, #tpu.memory_space<vmem>>, %arg2: memref<64x128xf32, #tpu.memory_space<vmem>>, %arg3: memref<1x128xf32, #tpu.memory_space<vmem>>, %arg4: memref<128x128xf32, #tpu.memory_space<vmem>>, %arg5: memref<1x128xf32, #tpu.memory_space<vmem>>, %arg6: memref<128x128xf32, #tpu.memory_space<vmem>>, %arg7: memref<1x128xf32, #tpu.memory_space<vmem>>, %arg8: memref<8x32xf32, #tpu.memory_space<vmem>>) attributes {dimension_semantics = [#tpu.dimension_semantics<parallel>], iteration_bounds = array<i64: 1>, scalar_prefetch = 0 : i64, scratch_operands = 0 : i64, tpu.core_type = #tpu.core_type<tc>, window_params = [{transform_indices = @transform_0, window_bounds = array<i64: 8, 64>}, {pipeline_mode = #tpu.pipeline_mode<synchronous>, transform_indices = @transform_1, window_bounds = array<i64: 64, 128>}, {pipeline_mode = #tpu.pipeline_mode<synchronous>, transform_indices = @transform_2, window_bounds = array<i64: 1, 128>}, {pipeline_mode = #tpu.pipeline_mode<synchronous>, transform_indices = @transform_3, window_bounds = array<i64: 128, 128>}, {pipeline_mode = #tpu.pipeline_mode<synchronous>, transform_indices = @transform_4, window_bounds = array<i64: 1, 128>}, {pipeline_mode = #tpu.pipeline_mode<synchronous>, transform_indices = @transform_5, window_bounds = array<i64: 128, 128>}, {pipeline_mode = #tpu.pipeline_mode<synchronous>, transform_indices = @transform_6, window_bounds = array<i64: 1, 128>}, {transform_indices = @transform_7, window_bounds = array<i64: 8, 32>}]} {
    %c0 = arith.constant 0 : index
    %c0_0 = arith.constant 0 : index
    %0 = vector.load %arg1[%c0, %c0_0] : memref<8x64xf32, #tpu.memory_space<vmem>>, vector<8x64xf32>
    %c0_1 = arith.constant 0 : index
    %c0_2 = arith.constant 0 : index
    %1 = vector.load %arg2[%c0_1, %c0_2] : memref<64x128xf32, #tpu.memory_space<vmem>>, vector<64x128xf32>
    %cst = arith.constant dense<0.000000e+00> : vector<8x128xf32>
    %2 = tpu.matmul %0, %1, %cst {dimension_numbers = #tpu.dot_dimension_numbers<[1], [0], [0], [1], [0, 0, 1, 1], [], []>} : vector<8x64xf32>, vector<64x128xf32>, vector<8x128xf32> -> vector<8x128xf32>
    %c0_3 = arith.constant 0 : index
    %c0_4 = arith.constant 0 : index
    %3 = vector.load %arg3[%c0_3, %c0_4] : memref<1x128xf32, #tpu.memory_space<vmem>>, vector<1x128xf32>
    %4 = vector.broadcast %3 : vector<1x128xf32> to vector<8x128xf32>
    %5 = arith.addf %2, %4 : vector<8x128xf32>
    %cst_5 = arith.constant 0.000000e+00 : f32
    %6 = vector.broadcast %cst_5 : f32 to vector<8x128xf32>
    %7 = arith.maximumf %5, %6 : vector<8x128xf32>
    %c0_6 = arith.constant 0 : index
    %c0_7 = arith.constant 0 : index
    %8 = vector.load %arg4[%c0_6, %c0_7] : memref<128x128xf32, #tpu.memory_space<vmem>>, vector<128x128xf32>
    %cst_8 = arith.constant dense<0.000000e+00> : vector<8x128xf32>
    %9 = tpu.matmul %7, %8, %cst_8 {dimension_numbers = #tpu.dot_dimension_numbers<[1], [0], [0], [1], [0, 0, 1, 1], [], []>} : vector<8x128xf32>, vector<128x128xf32>, vector<8x128xf32> -> vector<8x128xf32>
    %c0_9 = arith.constant 0 : index
    %c0_10 = arith.constant 0 : index
    %10 = vector.load %arg5[%c0_9, %c0_10] : memref<1x128xf32, #tpu.memory_space<vmem>>, vector<1x128xf32>
    %11 = vector.broadcast %10 : vector<1x128xf32> to vector<8x128xf32>
    %12 = arith.addf %9, %11 : vector<8x128xf32>
    %cst_11 = arith.constant 0.000000e+00 : f32
    %13 = vector.broadcast %cst_11 : f32 to vector<8x128xf32>
    %14 = arith.maximumf %12, %13 : vector<8x128xf32>
    %c0_12 = arith.constant 0 : index
    %c0_13 = arith.constant 0 : index
    %15 = vector.load %arg6[%c0_12, %c0_13] : memref<128x128xf32, #tpu.memory_space<vmem>>, vector<128x128xf32>
    %cst_14 = arith.constant dense<0.000000e+00> : vector<8x128xf32>
    %16 = tpu.matmul %14, %15, %cst_14 {dimension_numbers = #tpu.dot_dimension_numbers<[1], [0], [0], [1], [0, 0, 1, 1], [], []>} : vector<8x128xf32>, vector<128x128xf32>, vector<8x128xf32> -> vector<8x128xf32>
    %c0_15 = arith.constant 0 : index
    %c0_16 = arith.constant 0 : index
    %17 = vector.load %arg7[%c0_15, %c0_16] : memref<1x128xf32, #tpu.memory_space<vmem>>, vector<1x128xf32>
    %18 = vector.broadcast %17 : vector<1x128xf32> to vector<8x128xf32>
    %19 = arith.addf %16, %18 : vector<8x128xf32>
    %cst_17 = arith.constant 0.000000e+00 : f32
    %20 = vector.broadcast %cst_17 : f32 to vector<8x128xf32>
    %21 = arith.maximumf %19, %20 : vector<8x128xf32>
    %22 = vector.extract_strided_slice %21 {offsets = [0, 0], sizes = [8, 32], strides = [1, 1]} : vector<8x128xf32> to vector<8x32xf32>
    %c0_18 = arith.constant 0 : index
    %c0_19 = arith.constant 0 : index
    %23 = vector.load %arg8[%c0_18, %c0_19] : memref<8x32xf32, #tpu.memory_space<vmem>>, vector<8x32xf32>
    tpu.vector_store %arg8[%c0_18, %c0_19], %22 {strides = array<i32>} : memref<8x32xf32, #tpu.memory_space<vmem>>, vector<8x32xf32>,
    return
  }
  func.func @transform_0(%arg0: i32) -> (i32, i32) {
    %c0_i32 = arith.constant 0 : i32
    %c0_i32_0 = arith.constant 0 : i32
    return %arg0, %c0_i32 : i32, i32
  }
  func.func @transform_1(%arg0: i32) -> (i32, i32) {
    %c0_i32 = arith.constant 0 : i32
    %c0_i32_0 = arith.constant 0 : i32
    %c0_i32_1 = arith.constant 0 : i32
    return %c0_i32, %c0_i32_0 : i32, i32
  }
  func.func @transform_2(%arg0: i32) -> (i32, i32) {
    %c0_i32 = arith.constant 0 : i32
    %c0_i32_0 = arith.constant 0 : i32
    %c0_i32_1 = arith.constant 0 : i32
    return %c0_i32, %c0_i32_0 : i32, i32
  }
  func.func @transform_3(%arg0: i32) -> (i32, i32) {
    %c0_i32 = arith.constant 0 : i32
    %c0_i32_0 = arith.constant 0 : i32
    %c0_i32_1 = arith.constant 0 : i32
    return %c0_i32, %c0_i32_0 : i32, i32
  }
  func.func @transform_4(%arg0: i32) -> (i32, i32) {
    %c0_i32 = arith.constant 0 : i32
    %c0_i32_0 = arith.constant 0 : i32
    %c0_i32_1 = arith.constant 0 : i32
    return %c0_i32, %c0_i32_0 : i32, i32
  }
  func.func @transform_5(%arg0: i32) -> (i32, i32) {
    %c0_i32 = arith.constant 0 : i32
    %c0_i32_0 = arith.constant 0 : i32
    %c0_i32_1 = arith.constant 0 : i32
    return %c0_i32, %c0_i32_0 : i32, i32
  }
  func.func @transform_6(%arg0: i32) -> (i32, i32) {
    %c0_i32 = arith.constant 0 : i32
    %c0_i32_0 = arith.constant 0 : i32
    %c0_i32_1 = arith.constant 0 : i32
    return %c0_i32, %c0_i32_0 : i32, i32
  }
  func.func @transform_7(%arg0: i32) -> (i32, i32) {
    %c0_i32 = arith.constant 0 : i32
    %c0_i32_0 = arith.constant 0 : i32
    return %arg0, %c0_i32 : i32, i32
  }
}

</mosaic_0001>

<llo_original>
// kernel: tpu_custom_call.1
$region0: #{tpu_custom_call.1}
  #allocation0 [shape = 'u32[]', space=smem, size = 0x4, offset = 0x4, fixed_abs, tag = 'smem constant byte address 0x4 - core index']
  #allocation1 [shape = 'u32[72,128]{1,0:T(1,128)}', space=vmem, size = 0x9000, scoped, tag = 'internal scratch']
  %s0 = inlined_call_operand.hbm [shape: f32[8,64], index: 0, kind: input, shape index: {}]
  %s1 = inlined_call_operand.hbm [shape: f32[64,128], index: 1, kind: input, shape index: {}]
  %s2 = inlined_call_operand.vmem [shape: f32[1,128], index: 2, kind: input, shape index: {}]
  %s3 = inlined_call_operand.hbm [shape: f32[128,128], index: 3, kind: input, shape index: {}]
  %s4 = inlined_call_operand.vmem [shape: f32[1,128], index: 4, kind: input, shape index: {}]
  %s5 = inlined_call_operand.hbm [shape: f32[128,128], index: 5, kind: input, shape index: {}]
  %s6 = inlined_call_operand.vmem [shape: f32[1,128], index: 6, kind: input, shape index: {}]
  %s7 = inlined_call_operand.hbm [shape: f32[8,32], index: 7, kind: output, shape index: {}]
  %s8 = sld [smem:[#allocation0]]
  $region54: #{tpu_custom_call.1} parent=0
    _
  %s10 = ssub.s32 1, %s8
  %s11 = scalar_select 0, %s10, %s8
  $region1: #{tpu_custom_call.1} parent=0
    #allocation2 [shape = 'u8[4096]{0}', space=vmem, size = 0x1000, scoped, tag = 'input window, operand 0, single buffered']
    #allocation3 [shape = 's32[1]{0}', space=sflag, size = 0x4, scoped, tag = 'scoped memory for tpu_custom_call.1']
    #allocation4 [shape = 's32[1]{0}', space=sflag, size = 0x4, scoped, tag = 'scoped memory for tpu_custom_call.1']
    #allocation5 [shape = 'u8[32768]{0}', space=vmem, size = 0x8000, scoped, tag = 'input window, operand 1, single buffered']
    #allocation6 [shape = 's32[1]{0}', space=sflag, size = 0x4, scoped, tag = 'scoped memory for tpu_custom_call.1']
    #allocation7 [shape = 'u8[65536]{0}', space=vmem, size = 0x10000, scoped, tag = 'input window, operand 3, single buffered']
    #allocation8 [shape = 'u8[65536]{0}', space=vmem, size = 0x10000, scoped, tag = 'input window, operand 5, single buffered']
    #allocation9 [shape = 's32[1]{0}', space=sflag, size = 0x4, scoped, tag = 'scoped memory for tpu_custom_call.1']
    #allocation10 [shape = 'u8[4096]{0}', space=vmem, size = 0x1000, scoped, tag = 'output window, operand 0, single buffered']
    %12 = vsyncpa [#allocation3], 0
    %13 = vsyncpa [#allocation6], 0
    %14 = vsyncpa [#allocation9], 0
    %15 = vsyncpa [#allocation4], 0
    // Predicated region
    $region2: #{tpu_custom_call.1} parent=1 // pred_check
      _
    $region3: #{tpu_custom_call.1} parent=1 // pred_check_branch
      %17 = sbr.rel (0) target = $region5
    $region4: #{tpu_custom_call.1} parent=1 // pred_region
      %19 = vsyncadd [#allocation3], 0
      %s21 = sshll.u32 %s0, 4
      %s22 = int_to_ptr.hbm [resolvable:$true] %s21
      %s23 = sshll.u32 [#allocation2], 4
      %s24 = int_to_ptr.vmem [resolvable:$true] %s23
      %26 = dma.hbm_to_vmem [thread:$0]  %s22, 128, %s24, [#allocation3]
    $region5: #{tpu_custom_call.1} parent=1 // pred_fallthru
      _
    // Predicated region
    $region6: #{tpu_custom_call.1} parent=1 // pred_check
      _
    $region7: #{tpu_custom_call.1} parent=1 // pred_check_branch
      %28 = sbr.rel (0) target = $region9
    $region8: #{tpu_custom_call.1} parent=1 // pred_region
      %30 = vsyncadd [#allocation6], 0
      %s31 = sshll.u32 %s1, 4
      %s32 = int_to_ptr.hbm [resolvable:$true] %s31
      %s33 = sshll.u32 [#allocation5], 4
      %s34 = int_to_ptr.vmem [resolvable:$true] %s33
      %39 = dma.hbm_to_vmem [thread:$0]  %s32, 1024, %s34, [#allocation6], 128, 128, 8
    $region9: #{tpu_custom_call.1} parent=1 // pred_fallthru
      _
    // Predicated region
    $region10: #{tpu_custom_call.1} parent=1 // pred_check
      _
    $region11: #{tpu_custom_call.1} parent=1 // pred_check_branch
      %41 = sbr.rel (0) target = $region13
    $region12: #{tpu_custom_call.1} parent=1 // pred_region
      _
    $region13: #{tpu_custom_call.1} parent=1 // pred_fallthru
      _
    // Predicated region
    $region14: #{tpu_custom_call.1} parent=1 // pred_check
      _
    $region15: #{tpu_custom_call.1} parent=1 // pred_check_branch
      %43 = sbr.rel (0) target = $region17
    $region16: #{tpu_custom_call.1} parent=1 // pred_region
      %45 = vsyncadd [#allocation6], 0
      %s46 = sshll.u32 %s3, 4
      %s47 = int_to_ptr.hbm [resolvable:$true] %s46
      %s48 = sshll.u32 [#allocation7], 4
      %s49 = int_to_ptr.vmem [resolvable:$true] %s48
      %54 = dma.hbm_to_vmem [thread:$0]  %s47, 2048, %s49, [#allocation6], 128, 128, 8
    $region17: #{tpu_custom_call.1} parent=1 // pred_fallthru
      _
    // Predicated region
    $region18: #{tpu_custom_call.1} parent=1 // pred_check
      _
    $region19: #{tpu_custom_call.1} parent=1 // pred_check_branch
      %56 = sbr.rel (0) target = $region21
    $region20: #{tpu_custom_call.1} parent=1 // pred_region
      _
    $region21: #{tpu_custom_call.1} parent=1 // pred_fallthru
      _
    // Predicated region
    $region22: #{tpu_custom_call.1} parent=1 // pred_check
      _
    $region23: #{tpu_custom_call.1} parent=1 // pred_check_branch
      %58 = sbr.rel (0) target = $region25
    $region24: #{tpu_custom_call.1} parent=1 // pred_region
      %60 = vsyncadd [#allocation9], 0
      %s61 = sshll.u32 %s5, 4
      %s62 = int_to_ptr.hbm [resolvable:$true] %s61
      %s63 = sshll.u32 [#allocation8], 4
      %s64 = int_to_ptr.vmem [resolvable:$true] %s63
      %69 = dma.hbm_to_vmem [thread:$0]  %s62, 2048, %s64, [#allocation9], 128, 128, 8
    $region25: #{tpu_custom_call.1} parent=1 // pred_fallthru
      _
    // Predicated region
    $region26: #{tpu_custom_call.1} parent=1 // pred_check
      _
    $region27: #{tpu_custom_call.1} parent=1 // pred_check_branch
      %71 = sbr.rel (0) target = $region29
    $region28: #{tpu_custom_call.1} parent=1 // pred_region
      _
    $region29: #{tpu_custom_call.1} parent=1 // pred_fallthru
      _
    // Predicated region
    $region30: #{tpu_custom_call.1} parent=1 // pred_check
      _
    $region31: #{tpu_custom_call.1} parent=1 // pred_check_branch
      %73 = sbr.rel (0) target = $region33
    $region32: #{tpu_custom_call.1} parent=1 // pred_region
      %75 = dma.done [#allocation3], 128
    $region33: #{tpu_custom_call.1} parent=1 // pred_fallthru
      _
    // Predicated region
    $region34: #{tpu_custom_call.1} parent=1 // pred_check
      _
    $region35: #{tpu_custom_call.1} parent=1 // pred_check_branch
      %77 = sbr.rel (0) target = $region37
    $region36: #{tpu_custom_call.1} parent=1 // pred_region
      %79 = dma.done [#allocation6], 1024
    $region37: #{tpu_custom_call.1} parent=1 // pred_fallthru
      _
    // Predicated region
    $region38: #{tpu_custom_call.1} parent=1 // pred_check
      _
    $region39: #{tpu_custom_call.1} parent=1 // pred_check_branch
      %81 = sbr.rel (0) target = $region41
    $region40: #{tpu_custom_call.1} parent=1 // pred_region
      %83 = dma.done [#allocation6], 2048
    $region41: #{tpu_custom_call.1} parent=1 // pred_fallthru
      _
    // Predicated region
    $region42: #{tpu_custom_call.1} parent=1 // pred_check
      _
    $region43: #{tpu_custom_call.1} parent=1 // pred_check_branch
      %85 = sbr.rel (0) target = $region45
    $region44: #{tpu_custom_call.1} parent=1 // pred_region
      %87 = dma.done [#allocation9], 2048
    $region45: #{tpu_custom_call.1} parent=1 // pred_fallthru
      _
    %v88 = vld [vmem:[#allocation2] sm:$0xff]
    %v89 = vld [vmem:[#allocation5] sm:$0xff]
    %v90 = vld [vmem:[#allocation5 + $0x8] sm:$0xff]
    %v91 = vld [vmem:[#allocation5 + $0x10] sm:$0xff]
    %v92 = vld [vmem:[#allocation5 + $0x18] sm:$0xff]
    %v93 = vld [vmem:[#allocation5 + $0x20] sm:$0xff]
    %v94 = vld [vmem:[#allocation5 + $0x28] sm:$0xff]
    %v95 = vld [vmem:[#allocation5 + $0x30] sm:$0xff]
    %v96 = vld [vmem:[#allocation5 + $0x38] sm:$0xff]
    %v97 = vld [vmem:[%s2] sm:$0x1]
    %v99 = vperm.slane %v97, 0
    %vm101 = vcmask 523264
    %v103 = vsel %vm101, %v88, 0
    %105 = vmatpush.msra.mxu0 0.0
    %106 = vmatpush.msra.mxu0 0.0
    %107 = vmatpush.msra.mxu0 0.0
    %108 = vmatpush.msra.mxu0 0.0
    %109 = vmatpush.msra.mxu0 0.0
    %110 = vmatpush.msra.mxu0 0.0
    %111 = vmatpush.msra.mxu0 0.0
    %112 = vmatpush.msra.mxu0 0.0
    %113 = vmatpush.msra.mxu0 %v96
    %114 = vmatpush.msra.mxu0 %v95
    %115 = vmatpush.msra.mxu0 %v94
    %116 = vmatpush.msra.mxu0 %v93
    %117 = vmatpush.msra.mxu0 %v92
    %118 = vmatpush.msra.mxu0 %v91
    %119 = vmatpush.msra.mxu0 %v90
    %120 = vmatpush.msra.mxu0 %v89
    %121 = vmatmul.f32.gmra.mxu0 %v103
    %v122 = vpop.f32.mrf.mxu0
    %v123 = vadd.f32 %v99, %v122
    %124 = vdwg.mxu0
    %v125 = vmax.f32 %v123, 0.0
    %v126 = vld [vmem:[#allocation7] sm:$0xff]
    %v127 = vld [vmem:[#allocation7 + $0x8] sm:$0xff]
    %v128 = vld [vmem:[#allocation7 + $0x10] sm:$0xff]
    %v129 = vld [vmem:[#allocation7 + $0x18] sm:$0xff]
    %v130 = vld [vmem:[#allocation7 + $0x20] sm:$0xff]
    %v131 = vld [vmem:[#allocation7 + $0x28] sm:$0xff]
    %v132 = vld [vmem:[#allocation7 + $0x30] sm:$0xff]
    %v133 = vld [vmem:[#allocation7 + $0x38] sm:$0xff]
    %v134 = vld [vmem:[#allocation7 + $0x40] sm:$0xff]
    %v135 = vld [vmem:[#allocation7 + $0x48] sm:$0xff]
    %v136 = vld [vmem:[#allocation7 + $0x50] sm:$0xff]
    %v137 = vld [vmem:[#allocation7 + $0x58] sm:$0xff]
    %v138 = vld [vmem:[#allocation7 + $0x60] sm:$0xff]
    %v139 = vld [vmem:[#allocation7 + $0x68] sm:$0xff]
    %v140 = vld [vmem:[#allocation7 + $0x70] sm:$0xff]
    %v141 = vld [vmem:[#allocation7 + $0x78] sm:$0xff]
    %v142 = vld [vmem:[%s4] sm:$0x1]
    %v144 = vperm.slane %v142, 0
    %146 = vmatpush.msra.mxu0 %v141
    %147 = vmatpush.msra.mxu0 %v140
    %148 = vmatpush.msra.mxu0 %v139
    %149 = vmatpush.msra.mxu0 %v138
    %150 = vmatpush.msra.mxu0 %v137
    %151 = vmatpush.msra.mxu0 %v136
    %152 = vmatpush.msra.mxu0 %v135
    %153 = vmatpush.msra.mxu0 %v134
    %154 = vmatpush.msra.mxu0 %v133
    %155 = vmatpush.msra.mxu0 %v132
    %156 = vmatpush.msra.mxu0 %v131
    %157 = vmatpush.msra.mxu0 %v130
    %158 = vmatpush.msra.mxu0 %v129
    %159 = vmatpush.msra.mxu0 %v128
    %160 = vmatpush.msra.mxu0 %v127
    %161 = vmatpush.msra.mxu0 %v126
    %162 = vmatmul.f32.gmra.mxu0 %v125
    %v163 = vpop.f32.mrf.mxu0
    %v164 = vadd.f32 %v144, %v163
    %165 = vdwg.mxu0
    %v166 = vmax.f32 %v164, 0.0
    %v167 = vld [vmem:[#allocation8] sm:$0xff]
    %v168 = vld [vmem:[#allocation8 + $0x8] sm:$0xff]
    %v169 = vld [vmem:[#allocation8 + $0x10] sm:$0xff]
    %v170 = vld [vmem:[#allocation8 + $0x18] sm:$0xff]
    %v171 = vld [vmem:[#allocation8 + $0x20] sm:$0xff]
    %v172 = vld [vmem:[#allocation8 + $0x28] sm:$0xff]
    %v173 = vld [vmem:[#allocation8 + $0x30] sm:$0xff]
    %v174 = vld [vmem:[#allocation8 + $0x38] sm:$0xff]
    %v175 = vld [vmem:[#allocation8 + $0x40] sm:$0xff]
    %v176 = vld [vmem:[#allocation8 + $0x48] sm:$0xff]
    %v177 = vld [vmem:[#allocation8 + $0x50] sm:$0xff]
    %v178 = vld [vmem:[#allocation8 + $0x58] sm:$0xff]
    %v179 = vld [vmem:[#allocation8 + $0x60] sm:$0xff]
    %v180 = vld [vmem:[#allocation8 + $0x68] sm:$0xff]
    %v181 = vld [vmem:[#allocation8 + $0x70] sm:$0xff]
    %v182 = vld [vmem:[#allocation8 + $0x78] sm:$0xff]
    %v183 = vld [vmem:[%s6] sm:$0x1]
    %v185 = vperm.slane %v183, 0
    %187 = vmatpush.msra.mxu0 %v182
    %188 = vmatpush.msra.mxu0 %v181
    %189 = vmatpush.msra.mxu0 %v180
    %190 = vmatpush.msra.mxu0 %v179
    %191 = vmatpush.msra.mxu0 %v178
    %192 = vmatpush.msra.mxu0 %v177
    %193 = vmatpush.msra.mxu0 %v176
    %194 = vmatpush.msra.mxu0 %v175
    %195 = vmatpush.msra.mxu0 %v174
    %196 = vmatpush.msra.mxu0 %v173
    %197 = vmatpush.msra.mxu0 %v172
    %198 = vmatpush.msra.mxu0 %v171
    %199 = vmatpush.msra.mxu0 %v170
    %200 = vmatpush.msra.mxu0 %v169
    %201 = vmatpush.msra.mxu0 %v168
    %202 = vmatpush.msra.mxu0 %v167
    %203 = vmatmul.f32.gmra.mxu0 %v166
    %v204 = vpop.f32.mrf.mxu0
    %v205 = vadd.f32 %v185, %v204
    %206 = vdwg.mxu0
    %v207 = vmax.f32 %v205, 0.0
    %vm208 = vcmask 261120
    %209 = vst.msk [vmem:[#allocation10] sm:$0xff] %vm208, %v207
    // Predicated region
    $region46: #{tpu_custom_call.1} parent=1 // pred_check
      _
    $region47: #{tpu_custom_call.1} parent=1 // pred_check_branch
      %211 = sbr.rel (0) target = $region49
    $region48: #{tpu_custom_call.1} parent=1 // pred_region
      %213 = vsyncadd [#allocation4], 0
      %s215 = sshll.u32 [#allocation10], 4
      %s216 = int_to_ptr.vmem [resolvable:$true] %s215
      %s217 = sshll.u32 %s7, 4
      %s218 = int_to_ptr.hbm [resolvable:$true] %s217
      %220 = dma.vmem_to_hbm [thread:$0]  %s216, 128, %s218, [#allocation4]
    $region49: #{tpu_custom_call.1} parent=1 // pred_fallthru
      _
    // Predicated region
    $region50: #{tpu_custom_call.1} parent=1 // pred_check
      _
    $region51: #{tpu_custom_call.1} parent=1 // pred_check_branch
      %222 = sbr.rel (0) target = $region53
    $region52: #{tpu_custom_call.1} parent=1 // pred_region
      %224 = dma.done [#allocation4], 128
    $region53: #{tpu_custom_call.1} parent=1 // pred_fallthru
      _
    %225 = vsyncpa [#allocation3], 1
    %226 = vsyncpa [#allocation6], 1
    %227 = vsyncpa [#allocation9], 1
    %228 = vsyncpa [#allocation4], 1

</llo_original>
